<compile_context>
chip_gen: v5e
topology: v5e:2x2
jax: 0.10.0
libtpu: 0.0.40
codegen_flags: <defaults>
</compile_context>

<pallas_src>
import functools

import jax
import jax.numpy as jnp
from jax.experimental import pallas as pl
from jax.experimental.pallas import tpu as pltpu


def _glob_avg_fc_kernel(x_ref, w_ref, b_ref, o_ref, acc_ref, *, l_total, tl, mask_l):
    # x_ref : (TN, C, TL) native-layout input tile
    # w_ref : (C, O) f32 weight, pre-transposed, 1/L folded in
    # b_ref : (1, O) f32 bias
    # acc_ref: (TN, C) f32 pooled-sum accumulator (resident across the L grid axis)
    lj = pl.program_id(1)

    @pl.when(lj == 0)
    def _():
        acc_ref[...] = jnp.zeros_like(acc_ref)

    x = x_ref[...]
    if mask_l:
        # Last L block may extend past L: zero the padded lanes before the reduce.
        lane = jax.lax.broadcasted_iota(jnp.int32, x.shape, 2)
        valid = l_total - lj * tl
        x = jnp.where(lane < valid, x, jnp.array(0, x.dtype))

    # Lane-axis reduce over L (XLU) with f32 accumulation; no f32 copy of the block.
    acc_ref[...] += jnp.sum(x, axis=-1, dtype=jnp.float32)          # (TN, C)

    @pl.when(lj == pl.num_programs(1) - 1)
    def _():
        out = jnp.dot(acc_ref[...], w_ref[...],
                      preferred_element_type=jnp.float32)           # (TN, O)
        o_ref[...] = (out + b_ref[...]).astype(o_ref.dtype)


def _round_down8(v):
    return (v // 8) * 8


def _choose_tiles(n, c, l, itemsize, x_block_budget=8 * 1024 * 1024):
    """Pick (TN, TL) so a double-buffered x block stays well inside scoped VMEM
    on every generation while keeping several pipelined grid steps over N."""
    bytes_per_lpos = c * itemsize
    rows_wanted = 8 if n >= 8 else n

    # L tile: full L if a rows_wanted-deep block fits (or L is too short to tile),
    # otherwise 128-aligned chunks (BlockSpec lane constraint).
    if l <= 128 or rows_wanted * l * bytes_per_lpos <= x_block_budget:
        tl = l
    else:
        tl = (x_block_budget // (rows_wanted * bytes_per_lpos)) // 128 * 128
        tl = int(max(128, min(tl, (l // 128) * 128)))

    # N tile: as many rows as fit, but keep >= ~8 grid steps when N allows and keep
    # TN a multiple of 8 (or == N) for friendly output layout.
    tn_fit = max(1, x_block_budget // (c * tl * itemsize))
    if n <= 8:
        tn = n
    else:
        tn_cap = max(8, _round_down8(-(-n // 8)))        # ~N/8 rows per step
        tn = max(8, _round_down8(min(tn_fit, tn_cap, n)))
    # TODO(synk): for pathologically wide rows (C*min(L,128)*8 rows >> budget) TN=8
    # can still overshoot the budget; vmem_limit_bytes below adapts up to ~48 MiB.
    return tn, tl


def glob_avg_output(x, w, b):
    """x: (N, C, L); w: (num_outputs, C) (torch.nn.Linear layout); b: (num_outputs,)."""
    N, C, L = x.shape
    O = w.shape[0]
    itemsize = jnp.dtype(x.dtype).itemsize

    # Tiny, grid-resident weight/bias kept in f32; fold the mean's 1/L into the weight
    # once (no per-step converts, no extra rounding to a narrow dtype).
    w_scaled = w.T.astype(jnp.float32) * (1.0 / float(L))            # (C, O)
    b2 = b.astype(jnp.float32).reshape(1, O)

    TN, TL = _choose_tiles(N, C, L, itemsize)
    grid = (pl.cdiv(N, TN), pl.cdiv(L, TL))

    # Explicit scoped-VMEM limit: 2x double-buffered x blocks + small residents,
    # safe on v5e (16 MiB default), v6e (32 MiB default) and v7x (64 MiB physical).
    x_block_bytes = TN * C * TL * itemsize
    vmem_limit = int(min(48 << 20, max(32 << 20, 2 * x_block_bytes + (8 << 20))))

    kernel = functools.partial(_glob_avg_fc_kernel,
                               l_total=L, tl=TL, mask_l=(L % TL != 0))

    flops = N * C * L + 2 * N * C * O
    bytes_accessed = N * C * L * itemsize + C * O * 4 + O * 4 + N * O * itemsize

    return pl.pallas_call(
        kernel,
        out_shape=jax.ShapeDtypeStruct((N, O), x.dtype),
        grid=grid,
        in_specs=[
            pl.BlockSpec((TN, C, TL), lambda i, j: (i, 0, j)),   # native (N, C, L) stream
            pl.BlockSpec((C, O), lambda i, j: (0, 0)),           # resident weight
            pl.BlockSpec((1, O), lambda i, j: (0, 0)),           # resident bias
        ],
        out_specs=pl.BlockSpec((TN, O), lambda i, j: (i, 0)),
        scratch_shapes=[pltpu.VMEM((TN, C), jnp.float32)],       # pooled-sum accumulator
        compiler_params=pltpu.CompilerParams(
            dimension_semantics=("parallel", "arbitrary"),       # N megacore / L reduction
            vmem_limit_bytes=vmem_limit,
        ),
        cost_estimate=pl.CostEstimate(flops=flops, transcendentals=0,
                                      bytes_accessed=bytes_accessed),
    )(x, w_scaled, b2)


if __name__ == "__main__":
    key = jax.random.PRNGKey(0)
    kx, kw, kb = jax.random.split(key, 3)

    # Small shapes consistent with the module: in_planes=C, num_outputs=O
    N, C, L, O = 2, 32, 16, 8

    x = jax.random.normal(kx, (N, C, L), dtype=jnp.float32)
    # Deterministic init mimicking nn.Linear's uniform(-1/sqrt(C), 1/sqrt(C))
    bound = 1.0 / float(C) ** 0.5
    w = jax.random.uniform(kw, (O, C), jnp.float32, -bound, bound)
    b = jax.random.uniform(kb, (O,), jnp.float32, -bound, bound)

    out = glob_avg_output(x, w, b)
    jax.block_until_ready(out)

    # Reference check in plain JAX
    ref = jnp.mean(x, axis=-1) @ w.T + b
    assert out.shape == (N, O)
    assert jnp.allclose(out, ref, atol=1e-5, rtol=1e-5)

    print("KERNEL_OK")
</pallas_src>

<mosaic_0001>
module attributes {stable_mosaic.version = 11 : i64} {
  func.func @_glob_avg_fc_kernel(%arg0: i32, %arg1: i32, %arg2: memref<2x32x16xf32, #tpu.memory_space<vmem>>, %arg3: memref<32x8xf32, #tpu.memory_space<vmem>>, %arg4: memref<1x8xf32, #tpu.memory_space<vmem>>, %arg5: memref<2x8xf32, #tpu.memory_space<vmem>>, %arg6: memref<2x32xf32, #tpu.memory_space<vmem>>) attributes {dimension_semantics = [#tpu.dimension_semantics<parallel>, #tpu.dimension_semantics<arbitrary>], iteration_bounds = array<i64: 1, 1>, scalar_prefetch = 0 : i64, scratch_operands = 1 : i64, tpu.core_type = #tpu.core_type<tc>, window_params = [{transform_indices = @transform_0, window_bounds = array<i64: 2, 32, 16>}, {pipeline_mode = #tpu.pipeline_mode<synchronous>, transform_indices = @transform_1, window_bounds = array<i64: 32, 8>}, {pipeline_mode = #tpu.pipeline_mode<synchronous>, transform_indices = @transform_2, window_bounds = array<i64: 1, 8>}, {transform_indices = @transform_3, window_bounds = array<i64: 2, 8>}]} {
    %c0_i32 = arith.constant 0 : i32
    %0 = arith.cmpi eq, %arg1, %c0_i32 : i32
    %1 = arith.extui %0 : i1 to i32
    %c0_i32_0 = arith.constant 0 : i32
    %2 = arith.cmpi ne, %1, %c0_i32_0 : i32
    scf.if %2 {
      %cst_9 = arith.constant 0.000000e+00 : f32
      %11 = vector.broadcast %cst_9 : f32 to vector<2x32xf32>
      %c0_10 = arith.constant 0 : index
      %c0_11 = arith.constant 0 : index
      %12 = vector.load %arg6[%c0_10, %c0_11] : memref<2x32xf32, #tpu.memory_space<vmem>>, vector<2x32xf32>
      tpu.vector_store %arg6[%c0_10, %c0_11], %11 {strides = array<i32>} : memref<2x32xf32, #tpu.memory_space<vmem>>, vector<2x32xf32>,
    } else {
    }
    %c0 = arith.constant 0 : index
    %c0_1 = arith.constant 0 : index
    %c0_2 = arith.constant 0 : index
    %3 = vector.load %arg2[%c0, %c0_1, %c0_2] : memref<2x32x16xf32, #tpu.memory_space<vmem>>, vector<2x32x16xf32>
    %c0_3 = arith.constant 0 : index
    %c0_4 = arith.constant 0 : index
    %4 = vector.load %arg6[%c0_3, %c0_4] : memref<2x32xf32, #tpu.memory_space<vmem>>, vector<2x32xf32>
    %cst = arith.constant dense<0.000000e+00> : vector<2x32xf32>
    %5 = vector.multi_reduction <add>, %3, %cst [2] : vector<2x32x16xf32> to vector<2x32xf32>
    %6 = arith.addf %4, %5 : vector<2x32xf32>
    %c0_5 = arith.constant 0 : index
    %c0_6 = arith.constant 0 : index
    %7 = vector.load %arg6[%c0_5, %c0_6] : memref<2x32xf32, #tpu.memory_space<vmem>>, vector<2x32xf32>
    tpu.vector_store %arg6[%c0_5, %c0_6], %6 {strides = array<i32>} : memref<2x32xf32, #tpu.memory_space<vmem>>, vector<2x32xf32>,
    %c0_i32_7 = arith.constant 0 : i32
    %8 = arith.cmpi eq, %arg1, %c0_i32_7 : i32
    %9 = arith.extui %8 : i1 to i32
    %c0_i32_8 = arith.constant 0 : i32
    %10 = arith.cmpi ne, %9, %c0_i32_8 : i32
    scf.if %10 {
      %c0_9 = arith.constant 0 : index
      %c0_10 = arith.constant 0 : index
      %11 = vector.load %arg6[%c0_9, %c0_10] : memref<2x32xf32, #tpu.memory_space<vmem>>, vector<2x32xf32>
      %c0_11 = arith.constant 0 : index
      %c0_12 = arith.constant 0 : index
      %12 = vector.load %arg3[%c0_11, %c0_12] : memref<32x8xf32, #tpu.memory_space<vmem>>, vector<32x8xf32>
      %cst_13 = arith.constant dense<0.000000e+00> : vector<2x8xf32>
      %13 = tpu.matmul %11, %12, %cst_13 {dimension_numbers = #tpu.dot_dimension_numbers<[1], [0], [0], [1], [0, 0, 1, 1], [], []>} : vector<2x32xf32>, vector<32x8xf32>, vector<2x8xf32> -> vector<2x8xf32>
      %c0_14 = arith.constant 0 : index
      %c0_15 = arith.constant 0 : index
      %14 = vector.load %arg4[%c0_14, %c0_15] : memref<1x8xf32, #tpu.memory_space<vmem>>, vector<1x8xf32>
      %15 = vector.broadcast %14 : vector<1x8xf32> to vector<2x8xf32>
      %16 = arith.addf %13, %15 : vector<2x8xf32>
      %c0_16 = arith.constant 0 : index
      %c0_17 = arith.constant 0 : index
      %17 = vector.load %arg5[%c0_16, %c0_17] : memref<2x8xf32, #tpu.memory_space<vmem>>, vector<2x8xf32>
      tpu.vector_store %arg5[%c0_16, %c0_17], %16 {strides = array<i32>} : memref<2x8xf32, #tpu.memory_space<vmem>>, vector<2x8xf32>,
    } else {
    }
    return
  }
  func.func @transform_0(%arg0: i32, %arg1: i32) -> (i32, i32, i32) {
    %c0_i32 = arith.constant 0 : i32
    %c0_i32_0 = arith.constant 0 : i32
    return %arg0, %c0_i32, %arg1 : i32, i32, i32
  }
  func.func @transform_1(%arg0: i32, %arg1: i32) -> (i32, i32) {
    %c0_i32 = arith.constant 0 : i32
    %c0_i32_0 = arith.constant 0 : i32
    %c0_i32_1 = arith.constant 0 : i32
    return %c0_i32, %c0_i32_0 : i32, i32
  }
  func.func @transform_2(%arg0: i32, %arg1: i32) -> (i32, i32) {
    %c0_i32 = arith.constant 0 : i32
    %c0_i32_0 = arith.constant 0 : i32
    %c0_i32_1 = arith.constant 0 : i32
    return %c0_i32, %c0_i32_0 : i32, i32
  }
  func.func @transform_3(%arg0: i32, %arg1: i32) -> (i32, i32) {
    %c0_i32 = arith.constant 0 : i32
    %c0_i32_0 = arith.constant 0 : i32
    return %arg0, %c0_i32 : i32, i32
  }
}

</mosaic_0001>

<llo_original>
// kernel: tpu_custom_call.1
$region0: #{tpu_custom_call.1}
  #allocation0 [shape = 'u32[]', space=smem, size = 0x4, offset = 0x4, fixed_abs, tag = 'smem constant byte address 0x4 - core index']
  #allocation1 [shape = 'u32[72,128]{1,0:T(1,128)}', space=vmem, size = 0x9000, scoped, tag = 'internal scratch']
  #allocation2 [shape = 'f32[2,32]{1,0:T(2,128)}', space=vmem, size = 0x400, scoped, tag = 'scratch operand']
  %s0 = inlined_call_operand.vmem [shape: f32[2,32,16], index: 0, kind: input, shape index: {}]
  %s1 = inlined_call_operand.vmem [shape: f32[32,8], index: 1, kind: input, shape index: {}]
  %s2 = inlined_call_operand.vmem [shape: f32[1,8], index: 2, kind: input, shape index: {}]
  %s3 = inlined_call_operand.hbm [shape: f32[2,8], index: 3, kind: output, shape index: {}]
  %s4 = sld [smem:[#allocation0]]
  $region30: #{tpu_custom_call.1} parent=0
    _
  %s6 = ssub.s32 1, %s4
  %s7 = scalar_select 0, %s6, %s4
  $region1: #{tpu_custom_call.1} parent=0
    #allocation3 [shape = 'u8[1024]{0}', space=vmem, size = 0x400, scoped, tag = 'output window, operand 0, single buffered']
    #allocation4 [shape = 's32[1]{0}', space=sflag, size = 0x4, scoped, tag = 'scoped memory for tpu_custom_call.1']
    %8 = vsyncpa [#allocation4], 0
    // Predicated region
    $region2: #{tpu_custom_call.1} parent=1 // pred_check
      _
    $region3: #{tpu_custom_call.1} parent=1 // pred_check_branch
      %10 = sbr.rel (0) target = $region5
    $region4: #{tpu_custom_call.1} parent=1 // pred_region
      _
    $region5: #{tpu_custom_call.1} parent=1 // pred_fallthru
      _
    // Predicated region
    $region6: #{tpu_custom_call.1} parent=1 // pred_check
      _
    $region7: #{tpu_custom_call.1} parent=1 // pred_check_branch
      %12 = sbr.rel (0) target = $region9
    $region8: #{tpu_custom_call.1} parent=1 // pred_region
      _
    $region9: #{tpu_custom_call.1} parent=1 // pred_fallthru
      _
    // Predicated region
    $region10: #{tpu_custom_call.1} parent=1 // pred_check
      _
    $region11: #{tpu_custom_call.1} parent=1 // pred_check_branch
      %14 = sbr.rel (0) target = $region13
    $region12: #{tpu_custom_call.1} parent=1 // pred_region
      _
    $region13: #{tpu_custom_call.1} parent=1 // pred_fallthru
      _
    %p15 = scmp.eq.s32.totalorder 0, 0
    // Predicated region
    $region14: #{tpu_custom_call.1} parent=1 // pred_check
      %p16 = pneg %p15
    $region15: #{tpu_custom_call.1} parent=1 // pred_check_branch
      %18 = sbr.rel (%p16) target = $region17
    $region16: #{tpu_custom_call.1} parent=1 // pred_region
      %vm19 = vcmask 254976
      %20 = vst.msk [vmem:[#allocation2] sm:$0x3] %vm19, 0.0
    $region17: #{tpu_custom_call.1} parent=1 // pred_fallthru
      _
    %v21 = vld [vmem:[%s0] sm:$0xff]
    %v22 = vld [vmem:[%s0 + $0x8] sm:$0xff]
    %v23 = vld [vmem:[%s0 + $0x10] sm:$0xff]
    %v24 = vld [vmem:[%s0 + $0x18] sm:$0xff]
    %v25 = vld [vmem:[%s0 + $0x20] sm:$0xff]
    %v26 = vld [vmem:[%s0 + $0x28] sm:$0xff]
    %v27 = vld [vmem:[%s0 + $0x30] sm:$0xff]
    %v28 = vld [vmem:[%s0 + $0x38] sm:$0xff]
    %v29 = vld [vmem:[#allocation2] sm:$0x3]
    %vm30 = vcmask 130048
    %v31 = vsel %vm30, %v21, 0.0
    %32 = vadd.xlane.f32.xlu0 %v31
    %v33 = vpop.xlane.xlu0 %32
    %v34 = vsel %vm30, %v22, 0.0
    %35 = vadd.xlane.f32.xlu0 %v34
    %v36 = vpop.xlane.xlu0 %35
    %v37 = vsel %vm30, %v23, 0.0
    %38 = vadd.xlane.f32.xlu0 %v37
    %v39 = vpop.xlane.xlu0 %38
    %v40 = vsel %vm30, %v24, 0.0
    %41 = vadd.xlane.f32.xlu0 %v40
    %v42 = vpop.xlane.xlu0 %41
    %v43 = vsel %vm30, %v25, 0.0
    %44 = vadd.xlane.f32.xlu0 %v43
    %v45 = vpop.xlane.xlu0 %44
    %v46 = vsel %vm30, %v26, 0.0
    %47 = vadd.xlane.f32.xlu0 %v46
    %v48 = vpop.xlane.xlu0 %47
    %v49 = vsel %vm30, %v27, 0.0
    %50 = vadd.xlane.f32.xlu0 %v49
    %v51 = vpop.xlane.xlu0 %50
    %v52 = vsel %vm30, %v28, 0.0
    %53 = vadd.xlane.f32.xlu0 %v52
    %v54 = vpop.xlane.xlu0 %53
    %v63 = vlaneseq
    %v64 = vand.u32 %v63, 127
    %v65 = vperm.slane %v33, %v64
    %v66 = vadd.s32 %v64, 4294967288
    %v67 = vperm.slane %v36, %v66
    %vm68 = vcmask 130112
    %v69 = vsel %vm68, %v67, %v65
    %v70 = vadd.s32 %v64, 4294967280
    %v71 = vperm.slane %v39, %v70
    %vm72 = vcmask 195712
    %v73 = vsel %vm72, %v71, %v69
    %v74 = vadd.s32 %v64, 4294967272
    %v75 = vperm.slane %v42, %v74
    %vm76 = vcmask 261312
    %v77 = vsel %vm76, %v75, %v73
    %v78 = vperm.slane %v45, %v64
    %v79 = vperm.slane %v48, %v66
    %v80 = vsel %vm68, %v79, %v78
    %v81 = vperm.slane %v51, %v70
    %v82 = vsel %vm72, %v81, %v80
    %v83 = vperm.slane %v54, %v74
    %v84 = vsel %vm76, %v83, %v82
    %vm85 = vcmask 1041409
    %v86 = vsel %vm85, %v84, %v77
    %v88 = vadd.f32 %v29, %v86
    %vm89 = vcmask 254976
    %90 = vst.msk [vmem:[#allocation2] sm:$0x3] %vm89, %v88
    // Predicated region
    $region18: #{tpu_custom_call.1} parent=1 // pred_check
      %p91 = pneg %p15
    $region19: #{tpu_custom_call.1} parent=1 // pred_check_branch
      %93 = sbr.rel (%p91) target = $region21
    $region20: #{tpu_custom_call.1} parent=1 // pred_region
      %v94 = vld [vmem:[#allocation2] sm:$0x3]
      %v95 = vld [vmem:[%s1] sm:$0xff]
      %v96 = vld [vmem:[%s1 + $0x8] sm:$0xff]
      %v97 = vld [vmem:[%s1 + $0x10] sm:$0xff]
      %v98 = vld [vmem:[%s1 + $0x18] sm:$0xff]
      %v99 = vld [vmem:[%s2] sm:$0x1]
      %v101 = vperm.slane %v99, 0
      %vm103 = vcmask 261120
      %v105 = vsel %vm103, %v94, 0
      %107 = vmatpush.msra.mxu0 0.0
      %108 = vmatpush.msra.mxu0 0.0
      %109 = vmatpush.msra.mxu0 0.0
      %110 = vmatpush.msra.mxu0 0.0
      %111 = vmatpush.msra.mxu0 0.0
      %112 = vmatpush.msra.mxu0 0.0
      %113 = vmatpush.msra.mxu0 0.0
      %114 = vmatpush.msra.mxu0 0.0
      %115 = vmatpush.msra.mxu0 0.0
      %116 = vmatpush.msra.mxu0 0.0
      %117 = vmatpush.msra.mxu0 0.0
      %118 = vmatpush.msra.mxu0 0.0
      %119 = vmatpush.msra.mxu0 %v98
      %120 = vmatpush.msra.mxu0 %v97
      %121 = vmatpush.msra.mxu0 %v96
      %122 = vmatpush.msra.mxu0 %v95
      %123 = vmatmul.f32.gmra.mxu0 %v105
      %v124 = vpop.f32.mrf.mxu0
      %v125 = vadd.f32 %v101, %v124
      %126 = vdwg.mxu0
      %vm127 = vcmask 58368
      %128 = vst.msk [vmem:[#allocation3] sm:$0x3] %vm127, %v125
    $region21: #{tpu_custom_call.1} parent=1 // pred_fallthru
      _
    // Predicated region
    $region22: #{tpu_custom_call.1} parent=1 // pred_check
      _
    $region23: #{tpu_custom_call.1} parent=1 // pred_check_branch
      %130 = sbr.rel (0) target = $region25
    $region24: #{tpu_custom_call.1} parent=1 // pred_region
      %132 = vsyncadd [#allocation4], 0
      %s134 = sshll.u32 [#allocation3], 4
      %s135 = int_to_ptr.vmem [resolvable:$true] %s134
      %s136 = sshll.u32 %s3, 4
      %s137 = int_to_ptr.hbm [resolvable:$true] %s136
      %139 = dma.vmem_to_hbm [thread:$0]  %s135, 32, %s137, [#allocation4]
    $region25: #{tpu_custom_call.1} parent=1 // pred_fallthru
      _
    // Predicated region
    $region26: #{tpu_custom_call.1} parent=1 // pred_check
      _
    $region27: #{tpu_custom_call.1} parent=1 // pred_check_branch
      %141 = sbr.rel (0) target = $region29
    $region28: #{tpu_custom_call.1} parent=1 // pred_region
      %143 = dma.done [#allocation4], 32
    $region29: #{tpu_custom_call.1} parent=1 // pred_fallthru
      _
    %144 = vsyncpa [#allocation4], 1

</llo_original>
